<compile_context>
chip_gen: v7x
topology: tpu7x:2x2x1
jax: 0.10.0
libtpu: 0.0.40
codegen_flags: <defaults>
</compile_context>

<pallas_src>
import functools

import jax
import jax.numpy as jnp
from jax.experimental import pallas as pl
from jax.experimental.pallas import tpu as pltpu


# Stand-in feature widths for the three backbones.
_COUT = {"densenet": 48, "resnet": 64, "vgg": 32}
_COUT_TOTAL = sum(_COUT.values())   # 144
_COUT_PAD = 256                     # pad fused Cout to full MXU width (v6e 2x256 MXU)
_NOUT_PAD = 128                     # lane-dense output block (cols 0..2 hold the 3 logits)


def _ensemble_kernel(p_ref, w_ref, b_ref, fcw_ref, fcb_ref, out_ref):
    """All three ensemble branches for one batch element, one MXU pass.

    p_ref   : (H*W, 9*Cin)        bf16 im2col patches for this batch element
    w_ref   : (9*Cin, 256)        bf16 conv weights, BN scale folded in, branches packed+padded
    b_ref   : (1, 256)            f32 folded-BN bias (zero in padded lanes)
    fcw_ref : (256, 128)          f32 block-diagonal heads, 1/(H*W) pool factor folded in
    fcb_ref : (1, 128)            f32 head biases
    out_ref : (1, 1, 128)         f32 logits (lanes 0/1/2 = densenet/resnet/vgg)
    """
    # conv3x3 (+BN scale) for all branches: single K=27, N=256 matmul, f32 accumulation.
    acc = jnp.dot(p_ref[...], w_ref[...], preferred_element_type=jnp.float32)
    acc = jnp.maximum(acc + b_ref[...], 0.0)            # BN bias + ReLU (VPU)
    feat = acc.sum(axis=0, keepdims=True)               # global pool (mean folded into fcw)
    logits = (jnp.dot(feat, fcw_ref[...], preferred_element_type=jnp.float32)
              + fcb_ref[...])                           # (1, 128)
    out_ref[...] = logits.reshape(1, 1, _NOUT_PAD)


def _fused_forward(x_nchw, w_p, b_p, fcw_p, fcb_p):
    """Run the fused ensemble. x_nchw: (B, Cin, H, W) float32."""
    B, cin, H, W = x_nchw.shape
    HW = H * W
    K = 9 * cin

    # Layout work done once, in the wrapper: NCHW -> NHWC, 'same' padding, im2col.
    x = jnp.transpose(x_nchw, (0, 2, 3, 1))
    xp = jnp.pad(x, ((0, 0), (1, 1), (1, 1), (0, 0)))
    patches = jnp.concatenate(
        [xp[:, dy:dy + H, dx:dx + W, :] for dy in range(3) for dx in range(3)],
        axis=-1).reshape(B * HW, K).astype(jnp.bfloat16)

    # Fold the mean-pool 1/(H*W) into the classifier weights (trace-time constant).
    fcw = (fcw_p * (1.0 / float(HW))).astype(jnp.float32)

    out = pl.pallas_call(
        _ensemble_kernel,
        out_shape=jax.ShapeDtypeStruct((B, 1, _NOUT_PAD), jnp.float32),
        grid=(B,),
        in_specs=[
            pl.BlockSpec((HW, K), lambda b: (b, 0)),              # per-batch patch slab
            pl.BlockSpec((K, _COUT_PAD), lambda b: (0, 0)),       # fused conv weights
            pl.BlockSpec((1, _COUT_PAD), lambda b: (0, 0)),       # fused BN bias
            pl.BlockSpec((_COUT_PAD, _NOUT_PAD), lambda b: (0, 0)),  # block-diag FC weights
            pl.BlockSpec((1, _NOUT_PAD), lambda b: (0, 0)),       # FC bias
        ],
        out_specs=pl.BlockSpec((1, 1, _NOUT_PAD), lambda b: (b, 0, 0)),
        compiler_params=pltpu.CompilerParams(
            dimension_semantics=("parallel",)),                   # 2 TCs on v7x; no-op v5e/v6e
    )(patches, w_p, b_p, fcw, fcb_p)

    logits = out.reshape(B, _NOUT_PAD)[:, :3]
    return logits[:, 0:1], logits[:, 1:2], logits[:, 2:3]


def _init_branch(key, cin, cout):
    k = jax.random.split(key, 5)
    w = jax.random.normal(k[0], (3, 3, cin, cout), jnp.float32) * 0.1
    scale = 1.0 + 0.05 * jax.random.normal(k[1], (1, cout), jnp.float32)
    bias = 0.05 * jax.random.normal(k[2], (1, cout), jnp.float32)
    fcw = jax.random.normal(k[3], (cout, 1), jnp.float32) * 0.1
    fcb = 0.05 * jax.random.normal(k[4], (1, 1), jnp.float32)
    return (w, scale, bias, fcw, fcb)


def _pack_branches(branches, cin):
    """Fold BN scale into conv weights and pack all branches along Cout (lane-dense).

    Returns:
      w_packed  : (9*cin, 256)  bf16  conv weights (BN scale folded), zero-padded lanes
      b_packed  : (1, 256)      f32   folded-BN bias
      fcw_packed: (256, 128)    f32   block-diagonal classifier (col i = branch i)
      fcb_packed: (1, 128)      f32   classifier biases
    """
    K = 9 * cin
    w_packed = jnp.zeros((K, _COUT_PAD), jnp.float32)
    b_packed = jnp.zeros((1, _COUT_PAD), jnp.float32)
    fcw_packed = jnp.zeros((_COUT_PAD, _NOUT_PAD), jnp.float32)
    fcb_packed = jnp.zeros((1, _NOUT_PAD), jnp.float32)
    off = 0
    for i, (w, scale, bias, fcw, fcb) in enumerate(branches):
        cout = w.shape[-1]
        w2d = (w * scale).reshape(K, cout)                 # fold BN scale into conv weights
        w_packed = w_packed.at[:, off:off + cout].set(w2d)
        b_packed = b_packed.at[:, off:off + cout].set(bias)
        fcw_packed = fcw_packed.at[off:off + cout, i].set(fcw[:, 0])
        fcb_packed = fcb_packed.at[:, i].set(fcb[0, 0])
        off += cout
    return (w_packed.astype(jnp.bfloat16), b_packed, fcw_packed, fcb_packed)


class Ensemble:
    """JAX/Pallas analogue of the PyTorch Ensemble: forward(x) -> (x1, x2, x3)."""

    def __init__(self, key, cin=3):
        kd, kr, kv = jax.random.split(key, 3)
        self.cin = cin
        self.densenet_params = _init_branch(kd, cin, _COUT["densenet"])
        self.resnet_params = _init_branch(kr, cin, _COUT["resnet"])
        self.vgg_params = _init_branch(kv, cin, _COUT["vgg"])
        self._packed = _pack_branches(
            [self.densenet_params, self.resnet_params, self.vgg_params], cin)

    @functools.partial(jax.jit, static_argnums=0)
    def __call__(self, x_nchw):
        return _fused_forward(x_nchw, *self._packed)


def _reference(x_nchw, packed):
    """Pure-JAX reference of the fused math (same bf16 casts, f32 accumulation)."""
    w_p, b_p, fcw_p, fcb_p = packed
    B, cin, H, W = x_nchw.shape
    x = jnp.transpose(x_nchw, (0, 2, 3, 1))
    xp = jnp.pad(x, ((0, 0), (1, 1), (1, 1), (0, 0)))
    patches = jnp.concatenate(
        [xp[:, dy:dy + H, dx:dx + W, :] for dy in range(3) for dx in range(3)],
        axis=-1).reshape(B, H * W, 9 * cin).astype(jnp.bfloat16)
    acc = jnp.einsum("bmk,kn->bmn", patches, w_p, preferred_element_type=jnp.float32)
    acc = jnp.maximum(acc + b_p[None], 0.0)
    feat = acc.mean(axis=1)                                   # (B, 256)
    logits = feat @ fcw_p + fcb_p                             # (B, 128)
    return logits[:, :3]


if __name__ == "__main__":
    key = jax.random.PRNGKey(0)
    k_model, k_input = jax.random.split(key)

    model = Ensemble(k_model, cin=3)

    # Small NCHW image batch, consistent with the PyTorch forward signature.
    x = jax.random.normal(k_input, (2, 3, 16, 16), jnp.float32)

    x1, x2, x3 = model(x)
    jax.block_until_ready((x1, x2, x3))

    assert x1.shape == (2, 1) and x2.shape == (2, 1) and x3.shape == (2, 1)

    got = jnp.concatenate([x1, x2, x3], axis=-1)
    ref = _reference(x, model._packed)
    assert jnp.allclose(got, ref, rtol=5e-2, atol=5e-2), (got, ref)

    print("KERNEL_OK")
</pallas_src>

<mosaic_0001>
module attributes {stable_mosaic.version = 11 : i64} {
  func.func @_ensemble_kernel(%arg0: i32, %arg1: memref<256x27xbf16, #tpu.memory_space<vmem>>, %arg2: memref<27x256xbf16, #tpu.memory_space<vmem>>, %arg3: memref<1x256xf32, #tpu.memory_space<vmem>>, %arg4: memref<256x128xf32, #tpu.memory_space<vmem>>, %arg5: memref<1x128xf32, #tpu.memory_space<vmem>>, %arg6: memref<1x1x128xf32, #tpu.memory_space<vmem>>) attributes {dimension_semantics = [#tpu.dimension_semantics<parallel>], iteration_bounds = array<i64: 2>, scalar_prefetch = 0 : i64, scratch_operands = 0 : i64, tpu.core_type = #tpu.core_type<tc>, window_params = [{transform_indices = @transform_0, window_bounds = array<i64: 256, 27>}, {pipeline_mode = #tpu.pipeline_mode<synchronous>, transform_indices = @transform_1, window_bounds = array<i64: 27, 256>}, {pipeline_mode = #tpu.pipeline_mode<synchronous>, transform_indices = @transform_2, window_bounds = array<i64: 1, 256>}, {pipeline_mode = #tpu.pipeline_mode<synchronous>, transform_indices = @transform_3, window_bounds = array<i64: 256, 128>}, {pipeline_mode = #tpu.pipeline_mode<synchronous>, transform_indices = @transform_4, window_bounds = array<i64: 1, 128>}, {transform_indices = @transform_5, window_bounds = array<i64: 1, 1, 128>}]} {
    %c0 = arith.constant 0 : index
    %c0_0 = arith.constant 0 : index
    %0 = vector.load %arg1[%c0, %c0_0] : memref<256x27xbf16, #tpu.memory_space<vmem>>, vector<256x27xbf16>
    %c0_1 = arith.constant 0 : index
    %c0_2 = arith.constant 0 : index
    %1 = vector.load %arg2[%c0_1, %c0_2] : memref<27x256xbf16, #tpu.memory_space<vmem>>, vector<27x256xbf16>
    %cst = arith.constant dense<0.000000e+00> : vector<256x256xf32>
    %2 = tpu.matmul %0, %1, %cst {dimension_numbers = #tpu.dot_dimension_numbers<[1], [0], [0], [1], [0, 0, 1, 1], [], []>} : vector<256x27xbf16>, vector<27x256xbf16>, vector<256x256xf32> -> vector<256x256xf32>
    %c0_3 = arith.constant 0 : index
    %c0_4 = arith.constant 0 : index
    %3 = vector.load %arg3[%c0_3, %c0_4] : memref<1x256xf32, #tpu.memory_space<vmem>>, vector<1x256xf32>
    %4 = vector.broadcast %3 : vector<1x256xf32> to vector<256x256xf32>
    %5 = arith.addf %2, %4 : vector<256x256xf32>
    %cst_5 = arith.constant 0.000000e+00 : f32
    %6 = vector.broadcast %cst_5 : f32 to vector<256x256xf32>
    %7 = arith.maximumf %5, %6 : vector<256x256xf32>
    %cst_6 = arith.constant dense<0.000000e+00> : vector<256xf32>
    %8 = vector.multi_reduction <add>, %7, %cst_6 [0] : vector<256x256xf32> to vector<256xf32>
    %9 = vector.shape_cast %8 : vector<256xf32> to vector<1x256xf32>
    %c0_7 = arith.constant 0 : index
    %c0_8 = arith.constant 0 : index
    %10 = vector.load %arg4[%c0_7, %c0_8] : memref<256x128xf32, #tpu.memory_space<vmem>>, vector<256x128xf32>
    %cst_9 = arith.constant dense<0.000000e+00> : vector<1x128xf32>
    %11 = tpu.matmul %9, %10, %cst_9 {dimension_numbers = #tpu.dot_dimension_numbers<[1], [0], [0], [1], [0, 0, 1, 1], [], []>} : vector<1x256xf32>, vector<256x128xf32>, vector<1x128xf32> -> vector<1x128xf32>
    %c0_10 = arith.constant 0 : index
    %c0_11 = arith.constant 0 : index
    %12 = vector.load %arg5[%c0_10, %c0_11] : memref<1x128xf32, #tpu.memory_space<vmem>>, vector<1x128xf32>
    %13 = arith.addf %11, %12 : vector<1x128xf32>
    %14 = vector.shape_cast %13 : vector<1x128xf32> to vector<1x1x128xf32>
    %c0_12 = arith.constant 0 : index
    %c0_13 = arith.constant 0 : index
    %c0_14 = arith.constant 0 : index
    %15 = vector.load %arg6[%c0_12, %c0_13, %c0_14] : memref<1x1x128xf32, #tpu.memory_space<vmem>>, vector<1x1x128xf32>
    tpu.vector_store %arg6[%c0_12, %c0_13, %c0_14], %14 {strides = array<i32>} : memref<1x1x128xf32, #tpu.memory_space<vmem>>, vector<1x1x128xf32>,
    return
  }
  func.func @transform_0(%arg0: i32) -> (i32, i32) {
    %c0_i32 = arith.constant 0 : i32
    %c0_i32_0 = arith.constant 0 : i32
    return %arg0, %c0_i32 : i32, i32
  }
  func.func @transform_1(%arg0: i32) -> (i32, i32) {
    %c0_i32 = arith.constant 0 : i32
    %c0_i32_0 = arith.constant 0 : i32
    %c0_i32_1 = arith.constant 0 : i32
    return %c0_i32, %c0_i32_0 : i32, i32
  }
  func.func @transform_2(%arg0: i32) -> (i32, i32) {
    %c0_i32 = arith.constant 0 : i32
    %c0_i32_0 = arith.constant 0 : i32
    %c0_i32_1 = arith.constant 0 : i32
    return %c0_i32, %c0_i32_0 : i32, i32
  }
  func.func @transform_3(%arg0: i32) -> (i32, i32) {
    %c0_i32 = arith.constant 0 : i32
    %c0_i32_0 = arith.constant 0 : i32
    %c0_i32_1 = arith.constant 0 : i32
    return %c0_i32, %c0_i32_0 : i32, i32
  }
  func.func @transform_4(%arg0: i32) -> (i32, i32) {
    %c0_i32 = arith.constant 0 : i32
    %c0_i32_0 = arith.constant 0 : i32
    %c0_i32_1 = arith.constant 0 : i32
    return %c0_i32, %c0_i32_0 : i32, i32
  }
  func.func @transform_5(%arg0: i32) -> (i32, i32, i32) {
    %c0_i32 = arith.constant 0 : i32
    %c0_i32_0 = arith.constant 0 : i32
    %c0_i32_1 = arith.constant 0 : i32
    return %arg0, %c0_i32, %c0_i32_0 : i32, i32, i32
  }
}

</mosaic_0001>

<llo_original>
// kernel: a_call__.1
$region0: #{a_call__.1}
  #allocation0 [shape = 'u32[]', space=smem, size = 0x4, offset = 0x4, fixed_abs, tag = 'smem constant byte address 0x4 - core index']
  #allocation1 [shape = 'u32[144,128]{1,0:T(1,128)}', space=vmem, size = 0x12000, scoped, tag = 'internal scratch']
  %s0 = inlined_call_operand.vmem [shape: bf16[512,27], index: 0, kind: input, shape index: {}]
  %s1 = inlined_call_operand.vmem [shape: bf16[27,256], index: 1, kind: input, shape index: {}]
  %s2 = inlined_call_operand.vmem [shape: f32[1,256], index: 2, kind: input, shape index: {}]
  %s3 = inlined_call_operand.vmem [shape: f32[256,128], index: 3, kind: input, shape index: {}]
  %s4 = inlined_call_operand.vmem [shape: f32[1,128], index: 4, kind: input, shape index: {}]
  %s5 = inlined_call_operand.vmem [shape: f32[2,1,128], index: 5, kind: output, shape index: {}]
  %s6 = sld [smem:[#allocation0]]
  $region53: #{a_call__.1} parent=0
    _
  %s8 = ssub.s32 1, %s6
  %s9 = scalar_select 0, %s8, %s6
  loop: start=0, step=1, limit=4
  $region2: #{a_call__.1} parent=0 // loop_pre_header
    _
  $region3: #{a_call__.1} parent=0 // loop_header
    %s11 = sphi 0, %s15
    %p12 = scmp.ge.s32.totalorder %s11, 4
    %s21 = sphi 0, %s23
    %s24 = sphi 0, %s21
    %s25 = sphi 0, %s24
    %s41 = sphi 0, %s25
    %s45 = sphi 0, %s45
    %s47 = sphi 0, %s45
    %s48 = sphi 0, %s47
    %s62 = sphi 0, %s48
    %s66 = sphi 0, %s66
    %s68 = sphi 0, %s66
    %s69 = sphi 0, %s68
    %s83 = sphi 0, %s69
    %s87 = sphi 0, %s87
    %s89 = sphi 0, %s87
    %s90 = sphi 0, %s89
    %s104 = sphi 0, %s90
    %s108 = sphi 0, %s108
    %s110 = sphi 0, %s108
    %s111 = sphi 0, %s110
    %s125 = sphi 0, %s111
    %s131 = sphi 0, %s133
    %s134 = sphi 0, %s131
    %s135 = sphi 0, %s134
    %s151 = sphi 0, %s135
  $region4: #{a_call__.1} parent=0 // loop_header_branch
    %14 = sbr.rel (%p12) target = $region8
  $region5: #{a_call__.1} parent=0 // loop_body
    %s16 = ssub.s32 %s11, 1
    %s17 = ssub.s32 %s11, 2
    %s18 = sadd.s32 %s11, 1
    %s19 = ssub.s32 %s11, %s18
    %p20 = scmp.eq.s32.totalorder %s19, 0
    %s22 = sadd.s32 %s21, 1
    %s23 = scalar_select %p20, %s21, %s22
    %p26 = pneg %p20
    %p27 = scmp.eq.s32.totalorder %s11, 1
    %p28 = por %p26, %p27
    %p29 = scmp.ne.s32.totalorder %s21, %s24
    %p30 = scmp.eq.s32.totalorder %s11, 0
    %p31 = por %p29, %p30
    %p32 = scmp.ne.s32.totalorder %s21, %s24
    %p33 = scmp.eq.s32.totalorder %s16, 1
    %p34 = por %p32, %p33
    %p35 = scmp.ne.s32.totalorder %s24, %s25
    %p36 = scmp.eq.s32.totalorder %s16, 0
    %p37 = por %p35, %p36
    %p38 = scmp.ne.s32.totalorder %s24, %s25
    %p39 = scmp.eq.s32.totalorder %s17, 1
    %p40 = por %p38, %p39
    %p42 = scmp.ne.s32.totalorder %s25, %s41
    %p43 = scmp.eq.s32.totalorder %s17, 0
    %p44 = por %p42, %p43
    %s46 = sadd.s32 %s45, 1
    %p49 = scmp.eq.s32.totalorder %s11, 1
    %p50 = scmp.ne.s32.totalorder %s45, %s47
    %p51 = scmp.eq.s32.totalorder %s11, 0
    %p52 = por %p50, %p51
    %p53 = scmp.ne.s32.totalorder %s45, %s47
    %p54 = scmp.eq.s32.totalorder %s16, 1
    %p55 = por %p53, %p54
    %p56 = scmp.ne.s32.totalorder %s47, %s48
    %p57 = scmp.eq.s32.totalorder %s16, 0
    %p58 = por %p56, %p57
    %p59 = scmp.ne.s32.totalorder %s47, %s48
    %p60 = scmp.eq.s32.totalorder %s17, 1
    %p61 = por %p59, %p60
    %p63 = scmp.ne.s32.totalorder %s48, %s62
    %p64 = scmp.eq.s32.totalorder %s17, 0
    %p65 = por %p63, %p64
    %s67 = sadd.s32 %s66, 1
    %p70 = scmp.eq.s32.totalorder %s11, 1
    %p71 = scmp.ne.s32.totalorder %s66, %s68
    %p72 = scmp.eq.s32.totalorder %s11, 0
    %p73 = por %p71, %p72
    %p74 = scmp.ne.s32.totalorder %s66, %s68
    %p75 = scmp.eq.s32.totalorder %s16, 1
    %p76 = por %p74, %p75
    %p77 = scmp.ne.s32.totalorder %s68, %s69
    %p78 = scmp.eq.s32.totalorder %s16, 0
    %p79 = por %p77, %p78
    %p80 = scmp.ne.s32.totalorder %s68, %s69
    %p81 = scmp.eq.s32.totalorder %s17, 1
    %p82 = por %p80, %p81
    %p84 = scmp.ne.s32.totalorder %s69, %s83
    %p85 = scmp.eq.s32.totalorder %s17, 0
    %p86 = por %p84, %p85
    %s88 = sadd.s32 %s87, 1
    %p91 = scmp.eq.s32.totalorder %s11, 1
    %p92 = scmp.ne.s32.totalorder %s87, %s89
    %p93 = scmp.eq.s32.totalorder %s11, 0
    %p94 = por %p92, %p93
    %p95 = scmp.ne.s32.totalorder %s87, %s89
    %p96 = scmp.eq.s32.totalorder %s16, 1
    %p97 = por %p95, %p96
    %p98 = scmp.ne.s32.totalorder %s89, %s90
    %p99 = scmp.eq.s32.totalorder %s16, 0
    %p100 = por %p98, %p99
    %p101 = scmp.ne.s32.totalorder %s89, %s90
    %p102 = scmp.eq.s32.totalorder %s17, 1
    %p103 = por %p101, %p102
    %p105 = scmp.ne.s32.totalorder %s90, %s104
    %p106 = scmp.eq.s32.totalorder %s17, 0
    %p107 = por %p105, %p106
    %s109 = sadd.s32 %s108, 1
    %p112 = scmp.eq.s32.totalorder %s11, 1
    %p113 = scmp.ne.s32.totalorder %s108, %s110
    %p114 = scmp.eq.s32.totalorder %s11, 0
    %p115 = por %p113, %p114
    %p116 = scmp.ne.s32.totalorder %s108, %s110
    %p117 = scmp.eq.s32.totalorder %s16, 1
    %p118 = por %p116, %p117
    %p119 = scmp.ne.s32.totalorder %s110, %s111
    %p120 = scmp.eq.s32.totalorder %s16, 0
    %p121 = por %p119, %p120
    %p122 = scmp.ne.s32.totalorder %s110, %s111
    %p123 = scmp.eq.s32.totalorder %s17, 1
    %p124 = por %p122, %p123
    %p126 = scmp.ne.s32.totalorder %s111, %s125
    %p127 = scmp.eq.s32.totalorder %s17, 0
    %p128 = por %p126, %p127
    %s129 = ssub.s32 %s11, %s18
    %p130 = scmp.eq.s32.totalorder %s129, 0
    %s132 = sadd.s32 %s131, 1
    %s133 = scalar_select %p130, %s131, %s132
    %p136 = pneg %p130
    %p137 = scmp.eq.s32.totalorder %s11, 1
    %p138 = por %p136, %p137
    %p139 = scmp.ne.s32.totalorder %s131, %s134
    %p140 = scmp.eq.s32.totalorder %s11, 0
    %p141 = por %p139, %p140
    %p142 = scmp.ne.s32.totalorder %s131, %s134
    %p143 = scmp.eq.s32.totalorder %s16, 1
    %p144 = por %p142, %p143
    %p145 = scmp.ne.s32.totalorder %s134, %s135
    %p146 = scmp.eq.s32.totalorder %s16, 0
    %p147 = por %p145, %p146
    %p148 = scmp.ne.s32.totalorder %s134, %s135
    %p149 = scmp.eq.s32.totalorder %s17, 1
    %p150 = por %p148, %p149
    %p152 = scmp.ne.s32.totalorder %s135, %s151
    %p153 = scmp.eq.s32.totalorder %s17, 0
    %p154 = por %p152, %p153
    %p155 = scmp.le.s32.totalorder 1, %s11
    %p156 = scmp.lt.s32.totalorder %s11, 3
    %p157 = pnand %p155, %p156
    %p158 = pneg %p157
    // Predicated region
    $region9: #{a_call__.1} parent=5 // pred_check
      _
    $region10: #{a_call__.1} parent=5 // pred_check_branch
      %160 = sbr.rel (%p157) target = $region12
    $region11: #{a_call__.1} parent=5 // pred_region
      %s161 = ssub.s32 %s11, 1
      // Predicated region
      $region13: #{a_call__.1} parent=11 // pred_check
        %p162 = pneg %p58
      $region14: #{a_call__.1} parent=11 // pred_check_branch
        %164 = sbr.rel (%p162) target = $region16
      $region15: #{a_call__.1} parent=11 // pred_region
        _
      $region16: #{a_call__.1} parent=11 // pred_fallthru
        _
      // Predicated region
      $region17: #{a_call__.1} parent=11 // pred_check
        %p165 = pneg %p79
      $region18: #{a_call__.1} parent=11 // pred_check_branch
        %167 = sbr.rel (%p165) target = $region20
      $region19: #{a_call__.1} parent=11 // pred_region
        _
      $region20: #{a_call__.1} parent=11 // pred_fallthru
        _
      // Predicated region
      $region21: #{a_call__.1} parent=11 // pred_check
        %p168 = pneg %p100
      $region22: #{a_call__.1} parent=11 // pred_check_branch
        %170 = sbr.rel (%p168) target = $region24
      $region23: #{a_call__.1} parent=11 // pred_region
        _
      $region24: #{a_call__.1} parent=11 // pred_fallthru
        _
      // Predicated region
      $region25: #{a_call__.1} parent=11 // pred_check
        %p171 = pneg %p121
      $region26: #{a_call__.1} parent=11 // pred_check_branch
        %173 = sbr.rel (%p171) target = $region28
      $region27: #{a_call__.1} parent=11 // pred_region
        _
      $region28: #{a_call__.1} parent=11 // pred_fallthru
        _
    $region12: #{a_call__.1} parent=5 // pred_fallthru
      _
    %p174 = scmp.lt.s32.totalorder %s11, 2
    // Predicated region
    $region29: #{a_call__.1} parent=5 // pred_check
      %p175 = pneg %p174
    $region30: #{a_call__.1} parent=5 // pred_check_branch
      %177 = sbr.rel (%p175) target = $region32
    $region31: #{a_call__.1} parent=5 // pred_region
      // Predicated region
      $region33: #{a_call__.1} parent=31 // pred_check
        %p178 = pneg %p31
      $region34: #{a_call__.1} parent=31 // pred_check_branch
        %180 = sbr.rel (%p178) target = $region36
      $region35: #{a_call__.1} parent=31 // pred_region
        %s181 = smul.u32 32, %s11
        %p182 = scmp.lt.s32.totalorder %s181, 63
        %s183 = scalar_select %p182, %s181, 63
        %s184 = smul.addr %s183, 4
        %s185 = scalar_lea.vmem %s0, %s184
        %s186 = smul.u32 32, %s11
      $region36: #{a_call__.1} parent=31 // pred_fallthru
        _
    $region32: #{a_call__.1} parent=5 // pred_fallthru
      _
    %p187 = scmp.le.s32.totalorder 1, %s11
    %p188 = scmp.lt.s32.totalorder %s11, 3
    %p189 = pnand %p187, %p188
    %p190 = pneg %p189
    // Predicated region
    $region37: #{a_call__.1} parent=5 // pred_check
      _
    $region38: #{a_call__.1} parent=5 // pred_check_branch
      %192 = sbr.rel (%p189) target = $region40
    $region39: #{a_call__.1} parent=5 // pred_region
      %s193 = ssub.s32 %s11, 1
      %s194 = smul.u32 32, %s16
      %p195 = scmp.lt.s32.totalorder %s194, 63
      %s196 = scalar_select %p195, %s194, 63
      %s197 = smul.addr %s196, 4
      %s198 = scalar_lea.vmem %s0, %s197
      %p199 = pneg %p37
      %p200 = pneg %p34
      %p201 = pneg %p58
      %p202 = pneg %p55
      %p203 = pneg %p79
      %p204 = pneg %p76
      %p205 = pneg %p100
      %p206 = pneg %p97
      %p207 = pneg %p121
      %p208 = pneg %p118
      %p209 = pneg %p147
      %p210 = pneg %p144
      %p211 = scmp.lt.s32.totalorder %s16, 1
      %s212 = scalar_select %p211, %s16, 1
      %s213 = scalar_lea.vmem %s5, %s212
      %s214 = smul.u32 32, %s16
      %p215 = scmp.lt.s32.totalorder %s214, 63
      %s216 = scalar_select %p215, %s214, 63
      %s217 = smul.addr %s216, 4
      %s218 = scalar_lea.vmem %s0, %s217
      %s219 = smul.u32 32, %s16
      %p220 = scmp.lt.s32.totalorder %s16, 1
      %s221 = scalar_select %p220, %s16, 1
      %s222 = scalar_lea.vmem %s5, %s221
      %v224 = vld [vmem:[%s218] sm:$0xf]
      %v225 = vld [vmem:[%s218 + $0x4] sm:$0xf]
      %v226 = vld [vmem:[%s218 + $0x8] sm:$0xf]
      %v227 = vld [vmem:[%s218 + $0xc] sm:$0xf]
      %v228 = vld [vmem:[%s218 + $0x10] sm:$0xf]
      %v229 = vld [vmem:[%s218 + $0x14] sm:$0xf]
      %v230 = vld [vmem:[%s218 + $0x18] sm:$0xf]
      %v231 = vld [vmem:[%s218 + $0x1c] sm:$0xf]
      %v232 = vld [vmem:[%s218 + $0x20] sm:$0xf]
      %v233 = vld [vmem:[%s218 + $0x24] sm:$0xf]
      %v234 = vld [vmem:[%s218 + $0x28] sm:$0xf]
      %v235 = vld [vmem:[%s218 + $0x2c] sm:$0xf]
      %v236 = vld [vmem:[%s218 + $0x30] sm:$0xf]
      %v237 = vld [vmem:[%s218 + $0x34] sm:$0xf]
      %v238 = vld [vmem:[%s218 + $0x38] sm:$0xf]
      %v239 = vld [vmem:[%s218 + $0x3c] sm:$0xf]
      %v240 = vld [vmem:[%s218 + $0x40] sm:$0xf]
      %v241 = vld [vmem:[%s218 + $0x44] sm:$0xf]
      %v242 = vld [vmem:[%s218 + $0x48] sm:$0xf]
      %v243 = vld [vmem:[%s218 + $0x4c] sm:$0xf]
      %v244 = vld [vmem:[%s218 + $0x50] sm:$0xf]
      %v245 = vld [vmem:[%s218 + $0x54] sm:$0xf]
      %v246 = vld [vmem:[%s218 + $0x58] sm:$0xf]
      %v247 = vld [vmem:[%s218 + $0x5c] sm:$0xf]
      %v248 = vld [vmem:[%s218 + $0x60] sm:$0xf]
      %v249 = vld [vmem:[%s218 + $0x64] sm:$0xf]
      %v250 = vld [vmem:[%s218 + $0x68] sm:$0xf]
      %v251 = vld [vmem:[%s218 + $0x6c] sm:$0xf]
      %v252 = vld [vmem:[%s218 + $0x70] sm:$0xf]
      %v253 = vld [vmem:[%s218 + $0x74] sm:$0xf]
      %v254 = vld [vmem:[%s218 + $0x78] sm:$0xf]
      %v255 = vld [vmem:[%s218 + $0x7c] sm:$0xf]
      %v256 = vld [vmem:[%s1] sm:$0xff]
      %v257 = vld [vmem:[%s1 + $0x8] sm:$0xff]
      %v258 = vld [vmem:[%s1 + $0x10] sm:$0xff]
      %v259 = vld [vmem:[%s1 + $0x18] sm:$0x33]
      %v260 = vld [vmem:[%s2] sm:$0x3]
      %v262 = vlaneseq
      %v263 = vshrl.u32 %v262, 7
      %v264 = vsub.s32 0, %v263
      %v265 = vrot.slane %v260, %v264
      %v266 = vlaneseq
      %v267 = vshrl.u32 %v266, 7
      %v268 = vsub.s32 1, %v267
      %v269 = vrot.slane %v260, %v268
      %v304 = vunpack.c.l.b16 %v224
      %v305 = vunpack.c.l.b16 %v225
      %v306 = vunpack.c.l.b16 %v226
      %v307 = vunpack.c.l.b16 %v227
      %v308 = vunpack.c.l.b16 %v228
      %v309 = vunpack.c.l.b16 %v229
      %v310 = vunpack.c.l.b16 %v230
      %v311 = vunpack.c.l.b16 %v231
      %v312 = vunpack.c.l.b16 %v232
      %v313 = vunpack.c.l.b16 %v233
      %v314 = vunpack.c.l.b16 %v234
      %v315 = vunpack.c.l.b16 %v235
      %v316 = vunpack.c.l.b16 %v236
      %v317 = vunpack.c.l.b16 %v237
      %v318 = vunpack.c.l.b16 %v238
      %v319 = vunpack.c.l.b16 %v239
      %v320 = vunpack.c.l.b16 %v240
      %v321 = vunpack.c.l.b16 %v241
      %v322 = vunpack.c.l.b16 %v242
      %v323 = vunpack.c.l.b16 %v243
      %v324 = vunpack.c.l.b16 %v244
      %v325 = vunpack.c.l.b16 %v245
      %v326 = vunpack.c.l.b16 %v246
      %v327 = vunpack.c.l.b16 %v247
      %v328 = vunpack.c.l.b16 %v248
      %v329 = vunpack.c.l.b16 %v249
      %v330 = vunpack.c.l.b16 %v250
      %v331 = vunpack.c.l.b16 %v251
      %v332 = vunpack.c.l.b16 %v252
      %v333 = vunpack.c.l.b16 %v253
      %v334 = vunpack.c.l.b16 %v254
      %v335 = vunpack.c.l.b16 %v255
      %v336 = vpack.c.b16 %v305, %v304
      %v337 = vpack.c.b16 %v307, %v306
      %v338 = vpack.c.b16 %v309, %v308
      %v339 = vpack.c.b16 %v311, %v310
      %v340 = vpack.c.b16 %v313, %v312
      %v341 = vpack.c.b16 %v315, %v314
      %v342 = vpack.c.b16 %v317, %v316
      %v343 = vpack.c.b16 %v319, %v318
      %v344 = vpack.c.b16 %v321, %v320
      %v345 = vpack.c.b16 %v323, %v322
      %v346 = vpack.c.b16 %v325, %v324
      %v347 = vpack.c.b16 %v327, %v326
      %v348 = vpack.c.b16 %v329, %v328
      %v349 = vpack.c.b16 %v331, %v330
      %v350 = vpack.c.b16 %v333, %v332
      %v351 = vpack.c.b16 %v335, %v334
      %v356 = vunpack.c.l.b16 %v256
      %v357 = vunpack.c.h.b16 %v256
      %v358 = vunpack.c.l.b16 %v257
      %v359 = vunpack.c.h.b16 %v257
      %v360 = vunpack.c.l.b16 %v258
      %v361 = vunpack.c.h.b16 %v258
      %v362 = vunpack.c.l.b16 %v259
      %v363 = vunpack.c.h.b16 %v259
      %v364 = vpack.c.b16 %v358, %v356
      %v365 = vpack.c.b16 %v359, %v357
      %v366 = vpack.c.b16 %v362, %v360
      %v367 = vpack.c.b16 %v363, %v361
      %vm370 = vcmask 220160
      %v372 = vsel %vm370, %v336, 0
      %v375 = vsel %vm370, %v337, 0
      %v378 = vsel %vm370, %v338, 0
      %v381 = vsel %vm370, %v339, 0
      %v384 = vsel %vm370, %v340, 0
      %v387 = vsel %vm370, %v341, 0
      %v390 = vsel %vm370, %v342, 0
      %v393 = vsel %vm370, %v343, 0
      %v396 = vsel %vm370, %v344, 0
      %v399 = vsel %vm370, %v345, 0
      %v402 = vsel %vm370, %v346, 0
      %v405 = vsel %vm370, %v347, 0
      %v408 = vsel %vm370, %v348, 0
      %v411 = vsel %vm370, %v349, 0
      %v414 = vsel %vm370, %v350, 0
      %v417 = vsel %vm370, %v351, 0
      %vm419 = vcmask 1044480
      %vm420 = vcmask 1045504
      %v421 = vsel %vm419, 4294967295, 65535
      %v422 = vsel %vm420, %v421, 0
      %v424 = vand.u32 %v366, %v422
      %v427 = vand.u32 %v367, %v422
      %429 = vmatprep.subr.bf16.mxu0 %v365
      %430 = vmatpush1.bf16.msra.mxu0 %v364
      %431 = vmatprep.subr.bf16.mxu0 %v427
      %432 = vmatpush1.bf16.msra.mxu0 %v424
      %433 = vmatprep.subr.bf16.mxu0 0
      %434 = vmatpush1.bf16.msra.mxu0 0
      %435 = vmatprep.subr.bf16.mxu0 0
      %436 = vmatpush1.bf16.msra.mxu0 0
      %437 = vmatprep.subr.bf16.mxu0 0
      %438 = vmatpush1.bf16.msra.mxu0 0
      %439 = vmatprep.subr.bf16.mxu0 0
      %440 = vmatpush1.bf16.msra.mxu0 0
      %441 = vmatprep.subr.bf16.mxu0 0
      %442 = vmatpush1.bf16.msra.mxu0 0
      %443 = vmatprep.subr.bf16.mxu0 0
      %444 = vmatpush1.bf16.msra.mxu0 0
      %445 = vmatprep.subr.bf16.mxu0 0
      %446 = vmatpush1.bf16.msra.mxu0 0
      %447 = vmatprep.subr.bf16.mxu0 0
      %448 = vmatpush1.bf16.msra.mxu0 0
      %449 = vmatprep.subr.bf16.mxu0 0
      %450 = vmatpush1.bf16.msra.mxu0 0
      %451 = vmatprep.subr.bf16.mxu0 0
      %452 = vmatpush1.bf16.msra.mxu0 0
      %453 = vmatprep.subr.bf16.mxu0 0
      %454 = vmatpush1.bf16.msra.mxu0 0
      %455 = vmatprep.subr.bf16.mxu0 0
      %456 = vmatpush1.bf16.msra.mxu0 0
      %457 = vmatprep.subr.bf16.mxu0 0
      %458 = vmatpush1.bf16.msra.mxu0 0
      %459 = vmatprep.subr.bf16.mxu0 0
      %460 = vmatpush1.bf16.msra.mxu0 0
      %461 = vmatprep.mubr.bf16.mxu0 0
      %462 = vmatmul.mubr.bf16.gmra.mrb[0].mxu0 %v372
      %v463 = vpop.f32.mrb[0].mxu0
      %v464 = vadd.f32 %v265, %v463
      %v465 = vpop.f32.mrb[0].mxu0
      %v466 = vadd.f32 %v269, %v465
      %v467 = vpop.f32.mrb[0].mxu0
      %v468 = vadd.f32 %v265, %v467
      %v469 = vpop.f32.mrb[0].mxu0
      %v470 = vadd.f32 %v269, %v469
      %471 = vmatprep.mubr.bf16.mxu0 0
      %472 = vmatmul.mubr.bf16.gmra.mrb[0].mxu0 %v375
      %v473 = vpop.f32.mrb[0].mxu0
      %v474 = vadd.f32 %v265, %v473
      %v475 = vpop.f32.mrb[0].mxu0
      %v476 = vadd.f32 %v269, %v475
      %v477 = vpop.f32.mrb[0].mxu0
      %v478 = vadd.f32 %v265, %v477
      %v479 = vpop.f32.mrb[0].mxu0
      %v480 = vadd.f32 %v269, %v479
      %481 = vmatprep.mubr.bf16.mxu0 0
      %482 = vmatmul.mubr.bf16.gmra.mrb[0].mxu0 %v378
      %v483 = vpop.f32.mrb[0].mxu0
      %v484 = vadd.f32 %v265, %v483
      %v485 = vpop.f32.mrb[0].mxu0
      %v486 = vadd.f32 %v269, %v485
      %v487 = vpop.f32.mrb[0].mxu0
      %v488 = vadd.f32 %v265, %v487
      %v489 = vpop.f32.mrb[0].mxu0
      %v490 = vadd.f32 %v269, %v489
      %491 = vmatprep.mubr.bf16.mxu0 0
      %492 = vmatmul.mubr.bf16.gmra.mrb[0].mxu0 %v381
      %v493 = vpop.f32.mrb[0].mxu0
      %v494 = vadd.f32 %v265, %v493
      %v495 = vpop.f32.mrb[0].mxu0
      %v496 = vadd.f32 %v269, %v495
      %v497 = vpop.f32.mrb[0].mxu0
      %v498 = vadd.f32 %v265, %v497
      %v499 = vpop.f32.mrb[0].mxu0
      %v500 = vadd.f32 %v269, %v499
      %501 = vmatprep.mubr.bf16.mxu0 0
      %502 = vmatmul.mubr.bf16.gmra.mrb[0].mxu0 %v384
      %v503 = vpop.f32.mrb[0].mxu0
      %v504 = vadd.f32 %v265, %v503
      %v505 = vpop.f32.mrb[0].mxu0
      %v506 = vadd.f32 %v269, %v505
      %v507 = vpop.f32.mrb[0].mxu0
      %v508 = vadd.f32 %v265, %v507
      %v509 = vpop.f32.mrb[0].mxu0
      %v510 = vadd.f32 %v269, %v509
      %511 = vmatprep.mubr.bf16.mxu0 0
      %512 = vmatmul.mubr.bf16.gmra.mrb[0].mxu0 %v387
      %v513 = vpop.f32.mrb[0].mxu0
      %v514 = vadd.f32 %v265, %v513
      %v515 = vpop.f32.mrb[0].mxu0
      %v516 = vadd.f32 %v269, %v515
      %v517 = vpop.f32.mrb[0].mxu0
      %v518 = vadd.f32 %v265, %v517
      %v519 = vpop.f32.mrb[0].mxu0
      %v520 = vadd.f32 %v269, %v519
      %521 = vmatprep.mubr.bf16.mxu0 0
      %522 = vmatmul.mubr.bf16.gmra.mrb[0].mxu0 %v390
      %v523 = vpop.f32.mrb[0].mxu0
      %v524 = vadd.f32 %v265, %v523
      %v525 = vpop.f32.mrb[0].mxu0
      %v526 = vadd.f32 %v269, %v525
      %v527 = vpop.f32.mrb[0].mxu0
      %v528 = vadd.f32 %v265, %v527
      %v529 = vpop.f32.mrb[0].mxu0
      %v530 = vadd.f32 %v269, %v529
      %531 = vmatprep.mubr.bf16.mxu0 0
      %532 = vmatmul.mubr.bf16.gmra.mrb[0].mxu0 %v393
      %v533 = vpop.f32.mrb[0].mxu0
      %v534 = vadd.f32 %v265, %v533
      %v535 = vpop.f32.mrb[0].mxu0
      %v536 = vadd.f32 %v269, %v535
      %v537 = vpop.f32.mrb[0].mxu0
      %v538 = vadd.f32 %v265, %v537
      %v539 = vpop.f32.mrb[0].mxu0
      %v540 = vadd.f32 %v269, %v539
      %541 = vmatprep.mubr.bf16.mxu0 0
      %542 = vmatmul.mubr.bf16.gmra.mrb[0].mxu0 %v396
      %v543 = vpop.f32.mrb[0].mxu0
      %v544 = vadd.f32 %v265, %v543
      %v545 = vpop.f32.mrb[0].mxu0
      %v546 = vadd.f32 %v269, %v545
      %v547 = vpop.f32.mrb[0].mxu0
      %v548 = vadd.f32 %v265, %v547
      %v549 = vpop.f32.mrb[0].mxu0
      %v550 = vadd.f32 %v269, %v549
      %551 = vmatprep.mubr.bf16.mxu0 0
      %552 = vmatmul.mubr.bf16.gmra.mrb[0].mxu0 %v399
      %v553 = vpop.f32.mrb[0].mxu0
      %v554 = vadd.f32 %v265, %v553
      %v555 = vpop.f32.mrb[0].mxu0
      %v556 = vadd.f32 %v269, %v555
      %v557 = vpop.f32.mrb[0].mxu0
      %v558 = vadd.f32 %v265, %v557
      %v559 = vpop.f32.mrb[0].mxu0
      %v560 = vadd.f32 %v269, %v559
      %561 = vmatprep.mubr.bf16.mxu0 0
      %562 = vmatmul.mubr.bf16.gmra.mrb[0].mxu0 %v402
      %v563 = vpop.f32.mrb[0].mxu0
      %v564 = vadd.f32 %v265, %v563
      %v565 = vpop.f32.mrb[0].mxu0
      %v566 = vadd.f32 %v269, %v565
      %v567 = vpop.f32.mrb[0].mxu0
      %v568 = vadd.f32 %v265, %v567
      %v569 = vpop.f32.mrb[0].mxu0
      %v570 = vadd.f32 %v269, %v569
      %571 = vmatprep.mubr.bf16.mxu0 0
      %572 = vmatmul.mubr.bf16.gmra.mrb[0].mxu0 %v405
      %v573 = vpop.f32.mrb[0].mxu0
      %v574 = vadd.f32 %v265, %v573
      %v575 = vpop.f32.mrb[0].mxu0
      %v576 = vadd.f32 %v269, %v575
      %v577 = vpop.f32.mrb[0].mxu0
      %v578 = vadd.f32 %v265, %v577
      %v579 = vpop.f32.mrb[0].mxu0
      %v580 = vadd.f32 %v269, %v579
      %581 = vmatprep.mubr.bf16.mxu0 0
      %582 = vmatmul.mubr.bf16.gmra.mrb[0].mxu0 %v408
      %v583 = vpop.f32.mrb[0].mxu0
      %v584 = vadd.f32 %v265, %v583
      %v585 = vpop.f32.mrb[0].mxu0
      %v586 = vadd.f32 %v269, %v585
      %v587 = vpop.f32.mrb[0].mxu0
      %v588 = vadd.f32 %v265, %v587
      %v589 = vpop.f32.mrb[0].mxu0
      %v590 = vadd.f32 %v269, %v589
      %591 = vmatprep.mubr.bf16.mxu0 0
      %592 = vmatmul.mubr.bf16.gmra.mrb[0].mxu0 %v411
      %v593 = vpop.f32.mrb[0].mxu0
      %v594 = vadd.f32 %v265, %v593
      %v595 = vpop.f32.mrb[0].mxu0
      %v596 = vadd.f32 %v269, %v595
      %v597 = vpop.f32.mrb[0].mxu0
      %v598 = vadd.f32 %v265, %v597
      %v599 = vpop.f32.mrb[0].mxu0
      %v600 = vadd.f32 %v269, %v599
      %601 = vmatprep.mubr.bf16.mxu0 0
      %602 = vmatmul.mubr.bf16.gmra.mrb[0].mxu0 %v414
      %v603 = vpop.f32.mrb[0].mxu0
      %v604 = vadd.f32 %v265, %v603
      %v605 = vpop.f32.mrb[0].mxu0
      %v606 = vadd.f32 %v269, %v605
      %v607 = vpop.f32.mrb[0].mxu0
      %v608 = vadd.f32 %v265, %v607
      %v609 = vpop.f32.mrb[0].mxu0
      %v610 = vadd.f32 %v269, %v609
      %611 = vmatprep.mubr.bf16.mxu0 0
      %612 = vmatmul.mubr.bf16.gmra.mrb[0].mxu0 %v417
      %v613 = vpop.f32.mrb[0].mxu0
      %v614 = vadd.f32 %v265, %v613
      %v615 = vpop.f32.mrb[0].mxu0
      %v616 = vadd.f32 %v269, %v615
      %v617 = vpop.f32.mrb[0].mxu0
      %v618 = vadd.f32 %v265, %v617
      %v619 = vpop.f32.mrb[0].mxu0
      %v620 = vadd.f32 %v269, %v619
      %621 = vdwg.mxu0
      %v622 = vmax.f32 %v464, 0.0
      %v623 = vmax.f32 %v466, 0.0
      %v624 = vmax.f32 %v468, 0.0
      %v625 = vmax.f32 %v470, 0.0
      %v626 = vmax.f32 %v474, 0.0
      %v627 = vmax.f32 %v476, 0.0
      %v628 = vmax.f32 %v478, 0.0
      %v629 = vmax.f32 %v480, 0.0
      %v630 = vmax.f32 %v484, 0.0
      %v631 = vmax.f32 %v486, 0.0
      %v632 = vmax.f32 %v488, 0.0
      %v633 = vmax.f32 %v490, 0.0
      %v634 = vmax.f32 %v494, 0.0
      %v635 = vmax.f32 %v496, 0.0
      %v636 = vmax.f32 %v498, 0.0
      %v637 = vmax.f32 %v500, 0.0
      %v638 = vmax.f32 %v504, 0.0
      %v639 = vmax.f32 %v506, 0.0
      %v640 = vmax.f32 %v508, 0.0
      %v641 = vmax.f32 %v510, 0.0
      %v642 = vmax.f32 %v514, 0.0
      %v643 = vmax.f32 %v516, 0.0
      %v644 = vmax.f32 %v518, 0.0
      %v645 = vmax.f32 %v520, 0.0
      %v646 = vmax.f32 %v524, 0.0
      %v647 = vmax.f32 %v526, 0.0
      %v648 = vmax.f32 %v528, 0.0
      %v649 = vmax.f32 %v530, 0.0
      %v650 = vmax.f32 %v534, 0.0
      %v651 = vmax.f32 %v536, 0.0
      %v652 = vmax.f32 %v538, 0.0
      %v653 = vmax.f32 %v540, 0.0
      %v654 = vmax.f32 %v544, 0.0
      %v655 = vmax.f32 %v546, 0.0
      %v656 = vmax.f32 %v548, 0.0
      %v657 = vmax.f32 %v550, 0.0
      %v658 = vmax.f32 %v554, 0.0
      %v659 = vmax.f32 %v556, 0.0
      %v660 = vmax.f32 %v558, 0.0
      %v661 = vmax.f32 %v560, 0.0
      %v662 = vmax.f32 %v564, 0.0
      %v663 = vmax.f32 %v566, 0.0
      %v664 = vmax.f32 %v568, 0.0
      %v665 = vmax.f32 %v570, 0.0
      %v666 = vmax.f32 %v574, 0.0
      %v667 = vmax.f32 %v576, 0.0
      %v668 = vmax.f32 %v578, 0.0
      %v669 = vmax.f32 %v580, 0.0
      %v670 = vmax.f32 %v584, 0.0
      %v671 = vmax.f32 %v586, 0.0
      %v672 = vmax.f32 %v588, 0.0
      %v673 = vmax.f32 %v590, 0.0
      %v674 = vmax.f32 %v594, 0.0
      %v675 = vmax.f32 %v596, 0.0
      %v676 = vmax.f32 %v598, 0.0
      %v677 = vmax.f32 %v600, 0.0
      %v678 = vmax.f32 %v604, 0.0
      %v679 = vmax.f32 %v606, 0.0
      %v680 = vmax.f32 %v608, 0.0
      %v681 = vmax.f32 %v610, 0.0
      %v682 = vmax.f32 %v614, 0.0
      %v683 = vmax.f32 %v616, 0.0
      %v684 = vmax.f32 %v618, 0.0
      %v685 = vmax.f32 %v620, 0.0
      %v686 = vadd.f32 %v622, %v624
      %v687 = vadd.f32 %v686, %v626
      %v688 = vadd.f32 %v687, %v628
      %v689 = vadd.f32 %v688, %v630
      %v690 = vadd.f32 %v689, %v632
      %v691 = vadd.f32 %v690, %v634
      %v692 = vadd.f32 %v691, %v636
      %v693 = vadd.f32 %v692, %v638
      %v694 = vadd.f32 %v693, %v640
      %v695 = vadd.f32 %v694, %v642
      %v696 = vadd.f32 %v695, %v644
      %v697 = vadd.f32 %v696, %v646
      %v698 = vadd.f32 %v697, %v648
      %v699 = vadd.f32 %v698, %v650
      %v700 = vadd.f32 %v699, %v652
      %v701 = vadd.f32 %v700, %v654
      %v702 = vadd.f32 %v701, %v656
      %v703 = vadd.f32 %v702, %v658
      %v704 = vadd.f32 %v703, %v660
      %v705 = vadd.f32 %v704, %v662
      %v706 = vadd.f32 %v705, %v664
      %v707 = vadd.f32 %v706, %v666
      %v708 = vadd.f32 %v707, %v668
      %v709 = vadd.f32 %v708, %v670
      %v710 = vadd.f32 %v709, %v672
      %v711 = vadd.f32 %v710, %v674
      %v712 = vadd.f32 %v711, %v676
      %v713 = vadd.f32 %v712, %v678
      %v714 = vadd.f32 %v713, %v680
      %v715 = vadd.f32 %v714, %v682
      %v716 = vadd.f32 %v715, %v684
      %v717 = vrot.slane %v716, 4
      %v718 = vadd.f32 %v716, %v717
      %v719 = vrot.slane %v718, 2
      %v720 = vadd.f32 %v718, %v719
      %v721 = vrot.slane %v720, 1
      %v722 = vadd.f32 %v720, %v721
      %v723 = vadd.f32 %v623, %v625
      %v724 = vadd.f32 %v723, %v627
      %v725 = vadd.f32 %v724, %v629
      %v726 = vadd.f32 %v725, %v631
      %v727 = vadd.f32 %v726, %v633
      %v728 = vadd.f32 %v727, %v635
      %v729 = vadd.f32 %v728, %v637
      %v730 = vadd.f32 %v729, %v639
      %v731 = vadd.f32 %v730, %v641
      %v732 = vadd.f32 %v731, %v643
      %v733 = vadd.f32 %v732, %v645
      %v734 = vadd.f32 %v733, %v647
      %v735 = vadd.f32 %v734, %v649
      %v736 = vadd.f32 %v735, %v651
      %v737 = vadd.f32 %v736, %v653
      %v738 = vadd.f32 %v737, %v655
      %v739 = vadd.f32 %v738, %v657
      %v740 = vadd.f32 %v739, %v659
      %v741 = vadd.f32 %v740, %v661
      %v742 = vadd.f32 %v741, %v663
      %v743 = vadd.f32 %v742, %v665
      %v744 = vadd.f32 %v743, %v667
      %v745 = vadd.f32 %v744, %v669
      %v746 = vadd.f32 %v745, %v671
      %v747 = vadd.f32 %v746, %v673
      %v748 = vadd.f32 %v747, %v675
      %v749 = vadd.f32 %v748, %v677
      %v750 = vadd.f32 %v749, %v679
      %v751 = vadd.f32 %v750, %v681
      %v752 = vadd.f32 %v751, %v683
      %v753 = vadd.f32 %v752, %v685
      %v754 = vrot.slane %v753, 4
      %v755 = vadd.f32 %v753, %v754
      %v756 = vrot.slane %v755, 2
      %v757 = vadd.f32 %v755, %v756
      %v758 = vrot.slane %v757, 1
      %v759 = vadd.f32 %v757, %v758
      %v760 = vld [vmem:[%s3] sm:$0xff]
      %v761 = vld [vmem:[%s3 + $0x8] sm:$0xff]
      %v762 = vld [vmem:[%s3 + $0x10] sm:$0xff]
      %v763 = vld [vmem:[%s3 + $0x18] sm:$0xff]
      %v764 = vld [vmem:[%s3 + $0x20] sm:$0xff]
      %v765 = vld [vmem:[%s3 + $0x28] sm:$0xff]
      %v766 = vld [vmem:[%s3 + $0x30] sm:$0xff]
      %v767 = vld [vmem:[%s3 + $0x38] sm:$0xff]
      %v768 = vld [vmem:[%s3 + $0x40] sm:$0xff]
      %v769 = vld [vmem:[%s3 + $0x48] sm:$0xff]
      %v770 = vld [vmem:[%s3 + $0x50] sm:$0xff]
      %v771 = vld [vmem:[%s3 + $0x58] sm:$0xff]
      %v772 = vld [vmem:[%s3 + $0x60] sm:$0xff]
      %v773 = vld [vmem:[%s3 + $0x68] sm:$0xff]
      %v774 = vld [vmem:[%s3 + $0x70] sm:$0xff]
      %v775 = vld [vmem:[%s3 + $0x78] sm:$0xff]
      %v776 = vld [vmem:[%s3 + $0x80] sm:$0xff]
      %v777 = vld [vmem:[%s3 + $0x88] sm:$0xff]
      %v778 = vld [vmem:[%s3 + $0x90] sm:$0xff]
      %v779 = vld [vmem:[%s3 + $0x98] sm:$0xff]
      %v780 = vld [vmem:[%s3 + $0xa0] sm:$0xff]
      %v781 = vld [vmem:[%s3 + $0xa8] sm:$0xff]
      %v782 = vld [vmem:[%s3 + $0xb0] sm:$0xff]
      %v783 = vld [vmem:[%s3 + $0xb8] sm:$0xff]
      %v784 = vld [vmem:[%s3 + $0xc0] sm:$0xff]
      %v785 = vld [vmem:[%s3 + $0xc8] sm:$0xff]
      %v786 = vld [vmem:[%s3 + $0xd0] sm:$0xff]
      %v787 = vld [vmem:[%s3 + $0xd8] sm:$0xff]
      %v788 = vld [vmem:[%s3 + $0xe0] sm:$0xff]
      %v789 = vld [vmem:[%s3 + $0xe8] sm:$0xff]
      %v790 = vld [vmem:[%s3 + $0xf0] sm:$0xff]
      %v791 = vld [vmem:[%s3 + $0xf8] sm:$0xff]
      %v792 = vld [vmem:[%s4] sm:$0x1]
      %793 = vmatprep.subr.mxu0 0.0
      %794 = vmatpush1.msra.mxu0 %v760
      %795 = vmatprep.subr.mxu0 0.0
      %796 = vmatpush1.msra.mxu0 %v761
      %797 = vmatprep.subr.mxu0 0.0
      %798 = vmatpush1.msra.mxu0 %v762
      %799 = vmatprep.subr.mxu0 0.0
      %800 = vmatpush1.msra.mxu0 %v763
      %801 = vmatprep.subr.mxu0 0.0
      %802 = vmatpush1.msra.mxu0 %v764
      %803 = vmatprep.subr.mxu0 0.0
      %804 = vmatpush1.msra.mxu0 %v765
      %805 = vmatprep.subr.mxu0 0.0
      %806 = vmatpush1.msra.mxu0 %v766
      %807 = vmatprep.subr.mxu0 0.0
      %808 = vmatpush1.msra.mxu0 %v767
      %809 = vmatprep.subr.mxu0 0.0
      %810 = vmatpush1.msra.mxu0 %v768
      %811 = vmatprep.subr.mxu0 0.0
      %812 = vmatpush1.msra.mxu0 %v769
      %813 = vmatprep.subr.mxu0 0.0
      %814 = vmatpush1.msra.mxu0 %v770
      %815 = vmatprep.subr.mxu0 0.0
      %816 = vmatpush1.msra.mxu0 %v771
      %817 = vmatprep.subr.mxu0 0.0
      %818 = vmatpush1.msra.mxu0 %v772
      %819 = vmatprep.subr.mxu0 0.0
      %820 = vmatpush1.msra.mxu0 %v773
      %821 = vmatprep.subr.mxu0 0.0
      %822 = vmatpush1.msra.mxu0 %v774
      %823 = vmatprep.subr.mxu0 0.0
      %824 = vmatpush1.msra.mxu0 %v775
      %825 = vmatprep.subr.mxu0 0.0
      %826 = vmatpush1.msra.mxu0 %v776
      %827 = vmatprep.subr.mxu0 0.0
      %828 = vmatpush1.msra.mxu0 %v777
      %829 = vmatprep.subr.mxu0 0.0
      %830 = vmatpush1.msra.mxu0 %v778
      %831 = vmatprep.subr.mxu0 0.0
      %832 = vmatpush1.msra.mxu0 %v779
      %833 = vmatprep.subr.mxu0 0.0
      %834 = vmatpush1.msra.mxu0 %v780
      %835 = vmatprep.subr.mxu0 0.0
      %836 = vmatpush1.msra.mxu0 %v781
      %837 = vmatprep.subr.mxu0 0.0
      %838 = vmatpush1.msra.mxu0 %v782
      %839 = vmatprep.subr.mxu0 0.0
      %840 = vmatpush1.msra.mxu0 %v783
      %841 = vmatprep.subr.mxu0 0.0
      %842 = vmatpush1.msra.mxu0 %v784
      %843 = vmatprep.subr.mxu0 0.0
      %844 = vmatpush1.msra.mxu0 %v785
      %845 = vmatprep.subr.mxu0 0.0
      %846 = vmatpush1.msra.mxu0 %v786
      %847 = vmatprep.subr.mxu0 0.0
      %848 = vmatpush1.msra.mxu0 %v787
      %849 = vmatprep.subr.mxu0 0.0
      %850 = vmatpush1.msra.mxu0 %v788
      %851 = vmatprep.subr.mxu0 0.0
      %852 = vmatpush1.msra.mxu0 %v789
      %853 = vmatprep.subr.mxu0 0.0
      %854 = vmatpush1.msra.mxu0 %v790
      %855 = vmatprep.subr.mxu0 0.0
      %856 = vmatpush1.msra.mxu0 %v791
      %857 = vmatprep.mubr.f32.mxu0 %v759
      %858 = vmatmul.mubr.f32.gmra.mrb[0].mxu0 %v722
      %v859 = vpop.f32.mrb[0].mxu0
      %v860 = vadd.f32 %v792, %v859
      %v861 = vpop.f32.mrb[0].mxu0
      %862 = vdwg.mxu0
      %863 = vst [vmem:[%s222] sm:$0x1] %v860
      %p864 = scmp.lt.s32.totalorder %s16, 1
      %s865 = scalar_select %p864, %s16, 1
      %s866 = scalar_lea.vmem %s5, %s865
      // Predicated region
      $region41: #{a_call__.1} parent=39 // pred_check
        %p867 = pneg %p144
      $region42: #{a_call__.1} parent=39 // pred_check_branch
        %869 = sbr.rel (%p867) target = $region44
      $region43: #{a_call__.1} parent=39 // pred_region
        _
      $region44: #{a_call__.1} parent=39 // pred_fallthru
        _
    $region40: #{a_call__.1} parent=5 // pred_fallthru
      _
    %p870 = scmp.le.s32.totalorder 2, %s11
    // Predicated region
    $region45: #{a_call__.1} parent=5 // pred_check
      %p871 = pneg %p870
    $region46: #{a_call__.1} parent=5 // pred_check_branch
      %873 = sbr.rel (%p871) target = $region48
    $region47: #{a_call__.1} parent=5 // pred_region
      %s874 = ssub.s32 %s11, 2
      // Predicated region
      $region49: #{a_call__.1} parent=47 // pred_check
        %p875 = pneg %p150
      $region50: #{a_call__.1} parent=47 // pred_check_branch
        %877 = sbr.rel (%p875) target = $region52
      $region51: #{a_call__.1} parent=47 // pred_region
        %p878 = scmp.lt.s32.totalorder %s17, 1
        %s879 = scalar_select %p878, %s17, 1
        %s880 = scalar_lea.vmem %s5, %s879
      $region52: #{a_call__.1} parent=47 // pred_fallthru
        _
    $region48: #{a_call__.1} parent=5 // pred_fallthru
      _
  $region6: #{a_call__.1} parent=0 // loop_footer
    %s15 = sadd.s32 1, %s11
  $region7: #{a_call__.1} parent=0 // loop_footer_branch
    %10 = sbr.rel target = $region3
  $region8: #{a_call__.1} parent=0 // loop_exit
    _

</llo_original>
